<compile_context>
chip_gen: v5e
topology: v5e:2x2
jax: 0.10.0
libtpu: 0.0.40
codegen_flags: <defaults>
</compile_context>

<pallas_src>
import functools
import inspect

import jax
import jax.numpy as jnp
from jax.experimental import pallas as pl
from jax.experimental.pallas import tpu as pltpu


def _cdiv(a, b):
    return -(-a // b)


def _round8(x):
    return _cdiv(max(int(x), 1), 8) * 8


def _supports_buffered_blockspec():
    try:
        if not hasattr(pl, "Buffered"):
            return False
        return "pipeline_mode" in inspect.signature(pl.BlockSpec).parameters
    except Exception:
        return False


_SUPPORTS_BUFFERED = _supports_buffered_blockspec()


def _vmem_budget_bytes():
    """Per-generation budget for the kernel working set (inputs + temps)."""
    try:
        cap = int(pltpu.get_tpu_info().vmem_capacity_bytes)
    except Exception:
        cap = 64 * 1024 * 1024            # conservative (v7x-sized) fallback
    # v5e/v6e: 128 MiB physical -> 28 MiB budget; v7x: 64 MiB -> ~21 MiB.
    return min(cap // 3, 28 * 1024 * 1024)


def _choose_block_rows(B, bytes_per_row, budget):
    tb = (budget // max(int(bytes_per_row), 1)) // 8 * 8
    tb = max(8, tb)
    # Cap at round8(cdiv(B, 2)): never exceeds the batch, and guarantees >= 2
    # grid steps for B > 8 so the "parallel" axis shards over v7x's 2 cores.
    return int(min(tb, _round8(_cdiv(B, 2))))


def _cfvqa_block_kernel(total_rows, has_vision, resident_cid,
                        class_id_ref, *refs):
    """Per-block partial sums -> out sublanes [fusion, question, vision, kl]."""
    if has_vision:
        la_ref, lq_ref, lv_ref, nde_ref, out_ref = refs
    else:
        la_ref, lq_ref, nde_ref, out_ref = refs
        lv_ref = None

    i = pl.program_id(0)
    TB, C = la_ref.shape
    zero = jnp.float32(0.0)

    if resident_cid:
        # class_id is a single resident block covering the whole padded batch.
        start = pl.multiple_of(i * TB, 8)
        cid = class_id_ref[pl.ds(start, TB), :]                  # [TB,1] i32
    else:
        cid = class_id_ref[...]                                  # [TB,1] i32

    cols = jax.lax.broadcasted_iota(jnp.int32, (TB, C), 1)       # [TB,C]
    rows = jax.lax.broadcasted_iota(jnp.int32, (TB, 1), 0) + i * TB
    valid = rows < total_rows                                    # [TB,1] bool
    sel_mask = (cols == cid) & valid                             # [TB,C] bool

    # CE needs only the selected shifted logit + the row logsumexp:
    #   CE_row = logZ - s[label].  No full log_softmax tile is built.
    # (Masking stays select-based so NaN/Inf garbage in padded rows is safe.)
    def _ce_partial(x_ref):
        s = x_ref[...].astype(jnp.float32)
        s = s - jnp.max(s, axis=-1, keepdims=True)
        logz = jnp.log(jnp.sum(jnp.exp(s), axis=-1, keepdims=True))  # [TB,1]
        return (jnp.sum(jnp.where(valid, logz, zero))
                - jnp.sum(jnp.where(sel_mask, s, zero)))

    # --- logits_all first: fusion CE and softmax p_te share exp / row-sum ---
    s_a = la_ref[...].astype(jnp.float32)
    s_a = s_a - jnp.max(s_a, axis=-1, keepdims=True)
    e_a = jnp.exp(s_a)
    z_a = jnp.sum(e_a, axis=-1, keepdims=True)                   # [TB,1]
    fusion_sum = (jnp.sum(jnp.where(valid, jnp.log(z_a), zero))
                  - jnp.sum(jnp.where(sel_mask, s_a, zero)))
    p_te = e_a * pl.reciprocal(z_a, approx=False)                # softmax

    # --- z_nde immediately after so p_te dies early.  With sum_c(p_te)==1:
    #       kl_row = logZ_nde - sum_c(p_te * s_nde);  lp_nde never built. ---
    s_n = nde_ref[...].astype(jnp.float32)
    s_n = s_n - jnp.max(s_n, axis=-1, keepdims=True)
    logz_n = jnp.log(jnp.sum(jnp.exp(s_n), axis=-1, keepdims=True))
    kl_sum = (jnp.sum(jnp.where(valid, logz_n, zero))
              - jnp.sum(jnp.where(valid, p_te * s_n, zero)))

    # --- remaining CE-only tensors ---
    question_sum = _ce_partial(lq_ref)
    vision_sum = _ce_partial(lv_ref) if has_vision else zero

    # Lane-padded per-block partials: sublane r holds partial r.
    r8 = jax.lax.broadcasted_iota(jnp.int32, (8, 128), 0)
    tile = jnp.where(r8 == 0, fusion_sum, zero)
    tile = jnp.where(r8 == 1, question_sum, tile)
    tile = jnp.where(r8 == 2, vision_sum, tile)
    tile = jnp.where(r8 == 3, kl_sum, tile)
    out_ref[0] = tile


@functools.partial(jax.jit, static_argnames=("question_loss_weight",
                                             "vision_loss_weight",
                                             "block_rows", "has_vision"))
def cfvqa_losses(logits_all, logits_q, logits_v, z_nde, class_id, gamma,
                 question_loss_weight=1.0, vision_loss_weight=1.0,
                 block_rows=None, has_vision=True):
    """Returns [loss, fusion_loss, question_loss, vision_loss, kl_loss]."""
    B, C = logits_all.shape
    inputs = ([logits_all, logits_q, logits_v, z_nde] if has_vision
              else [logits_all, logits_q, z_nde])
    itemsizes = [jnp.dtype(x.dtype).itemsize for x in inputs]

    budget = _vmem_budget_bytes()
    # Working set per batch row: each input double-buffered in native dtype
    # plus ~4 live f32 [TB, C] temporaries inside the kernel.
    bytes_per_row = sum(2 * C * it for it in itemsizes) + 4 * C * 4
    if block_rows is not None:
        tb = int(block_rows)
    else:
        tb = _choose_block_rows(B, bytes_per_row, budget)
    nb = _cdiv(B, tb)
    padded_rows = nb * tb

    # class_id: resident single block (sliced with pl.ds in-kernel) unless the
    # lane-padded table would be large; then fall back to per-block DMA.
    resident_cid = padded_rows * 128 * 4 <= (1 << 20)
    class_id1d = class_id.reshape(-1).astype(jnp.int32)
    if resident_cid:
        if padded_rows > B:
            class_id1d = jnp.pad(class_id1d, (0, padded_rows - B))
        class_id2d = class_id1d.reshape(padded_rows, 1)
        cid_spec = pl.BlockSpec((padded_rows, 1), lambda i: (0, 0))
        cid_vmem = 2 * padded_rows * 128 * 4
    else:
        class_id2d = class_id1d.reshape(B, 1)
        cid_spec = pl.BlockSpec((tb, 1), lambda i: (i, 0))
        cid_vmem = 2 * tb * 128 * 4

    # Explicit scoped-VMEM limit: estimated working set + headroom.
    est_ws = tb * bytes_per_row + cid_vmem + 2 * 8 * 128 * 4 + (2 << 20)
    vmem_limit = int(max(est_ws, 16 << 20))

    # Small-tile / many-steps regime: deepen the input pipeline.
    max_itemsize = max(itemsizes)
    small_tile = tb * C * max_itemsize < (128 << 10)
    if small_tile and nb > 2 and _SUPPORTS_BUFFERED:
        logits_spec = pl.BlockSpec((tb, C), lambda i: (i, 0),
                                   pipeline_mode=pl.Buffered(3))
    else:
        logits_spec = pl.BlockSpec((tb, C), lambda i: (i, 0))

    in_specs = [cid_spec] + [logits_spec] * len(inputs)
    kernel = functools.partial(_cfvqa_block_kernel, B, has_vision,
                               resident_cid)

    n_in = len(inputs)
    bytes_in = sum(int(x.size) * it for x, it in zip(inputs, itemsizes))
    cost = pl.CostEstimate(
        flops=int((3 * n_in + 4) * B * C),
        transcendentals=int(n_in * B * C),
        bytes_accessed=int(bytes_in + padded_rows * 4 + nb * 8 * 128 * 4),
    )

    partials = pl.pallas_call(
        kernel,
        out_shape=jax.ShapeDtypeStruct((nb, 8, 128), jnp.float32),
        grid=(nb,),
        in_specs=in_specs,
        out_specs=pl.BlockSpec((1, 8, 128), lambda i: (i, 0, 0)),
        compiler_params=pltpu.CompilerParams(
            dimension_semantics=("parallel",),
            vmem_limit_bytes=vmem_limit),
        cost_estimate=cost,
    )(class_id2d, *inputs)

    sums = jnp.sum(partials[:, :4, 0], axis=0)                   # [4]
    inv_b = jnp.float32(1.0 / B)
    fusion_loss = sums[0] * inv_b
    question_loss = sums[1] * inv_b
    vision_loss = sums[2] * inv_b
    kl_loss = sums[3] * inv_b

    gamma = jnp.asarray(gamma, jnp.float32)
    loss = (fusion_loss * gamma
            + jnp.float32(question_loss_weight) * question_loss
            + kl_loss)
    if has_vision:
        loss = loss + jnp.float32(vision_loss_weight) * vision_loss
    return jnp.stack([loss, fusion_loss, question_loss, vision_loss, kl_loss])


class CFVQACriterionBatchPallas:
    """Host-side wrapper reproducing CFVQACriterionBatch forward semantics."""

    def __init__(self, question_loss_weight=1.0, vision_loss_weight=1.0,
                 is_va=True, loose_batch_num='1'):
        self.is_va = is_va
        self.question_loss_weight = float(question_loss_weight)
        self.vision_loss_weight = float(vision_loss_weight)
        self.loose_batch_num = int(loose_batch_num)
        # gamma bookkeeping stays on-device: no per-step host sync.
        self.loss_tmp_list = []
        self.sum_list = [jnp.float32(0.0), jnp.float32(0.0)]
        self.gamma = jnp.float32(0.999)

    def forward(self, net_out, batch):
        class_id = batch['class_id']
        if class_id.ndim > 1:
            class_id = class_id[:, 0]          # == squeeze(1)
        # is_va=False uses the 3-input kernel variant (no dummy vision input).
        vals = cfvqa_losses(
            net_out['logits_all'], net_out['logits_q'],
            net_out['logits_v'] if self.is_va else None,
            net_out['z_nde'], class_id, self.gamma,
            question_loss_weight=self.question_loss_weight,
            vision_loss_weight=(self.vision_loss_weight if self.is_va else 0.0),
            has_vision=self.is_va)
        loss, fusion_loss, question_loss, vision_loss = (
            vals[0], vals[1], vals[2], vals[3])

        # Stateful gamma bookkeeping (device-side; updated gamma only affects
        # the NEXT forward call, as in the PyTorch module).
        self.loss_tmp_list.append(fusion_loss)
        if len(self.loss_tmp_list) == self.loose_batch_num:
            self.sum_list[-2] = self.sum_list[-1]
            new_sum = self.loss_tmp_list[0]
            for t in self.loss_tmp_list[1:]:
                new_sum = new_sum + t
            self.sum_list[-1] = new_sum
            ratio = self.sum_list[-2] / new_sum
            # ratio <= 0, nan (0/0) or inf (x/0) all collapse to 0.999,
            # matching the original try/except + min() logic.
            self.gamma = jnp.where(ratio > 0,
                                   jnp.minimum(ratio, jnp.float32(0.999)),
                                   jnp.float32(0.999))
            self.loss_tmp_list = []

        out = {'loss': loss, 'loss_mm_q': fusion_loss, 'loss_q': question_loss}
        if self.is_va:
            out['loss_v'] = vision_loss
        return out


def _reference(net_out, class_id, gamma, qw, vw):
    """Pure-JAX reference for verification."""
    def ce(logits, y):
        lp = jax.nn.log_softmax(logits.astype(jnp.float32), axis=-1)
        return -jnp.mean(jnp.take_along_axis(lp, y[:, None], axis=1))
    fusion = ce(net_out['logits_all'], class_id)
    q = ce(net_out['logits_q'], class_id)
    v = ce(net_out['logits_v'], class_id)
    p_te = jax.nn.softmax(net_out['logits_all'].astype(jnp.float32), axis=-1)
    lp_nde = jax.nn.log_softmax(net_out['z_nde'].astype(jnp.float32), axis=-1)
    kl = jnp.mean(jnp.sum(-p_te * lp_nde, axis=1))
    return fusion * gamma + qw * q + kl + vw * v, fusion, q, v, kl


if __name__ == "__main__":
    # --- Test 1: small shapes through the wrapper (auto tiling, 1 block) ---
    key = jax.random.PRNGKey(0)
    B, C = 8, 32
    k1, k2, k3, k4, k5 = jax.random.split(key, 5)
    net_out = {
        'logits_all': jax.random.normal(k1, (B, C), jnp.float32),
        'logits_q': jax.random.normal(k2, (B, C), jnp.float32),
        'logits_v': jax.random.normal(k3, (B, C), jnp.float32),
        'z_nde': jax.random.normal(k4, (B, C), jnp.float32),
    }
    class_id = jax.random.randint(k5, (B, 1), 0, C, jnp.int32)
    batch = {'class_id': class_id}

    crit = CFVQACriterionBatchPallas(question_loss_weight=1.0,
                                     vision_loss_weight=1.0, is_va=True)
    out = crit.forward(net_out, batch)
    jax.block_until_ready(out['loss'])

    ref_loss, ref_f, ref_q, ref_v, ref_kl = _reference(
        net_out, class_id[:, 0], 0.999, 1.0, 1.0)
    assert jnp.allclose(out['loss'], ref_loss, rtol=2e-5, atol=2e-5)
    assert jnp.allclose(out['loss_mm_q'], ref_f, rtol=2e-5, atol=2e-5)
    assert jnp.allclose(out['loss_q'], ref_q, rtol=2e-5, atol=2e-5)
    assert jnp.allclose(out['loss_v'], ref_v, rtol=2e-5, atol=2e-5)

    # --- Test 2: multi-block grid with a ragged tail (B % TB != 0) ---
    B2, C2 = 20, 160
    k1, k2, k3, k4, k5 = jax.random.split(jax.random.PRNGKey(1), 5)
    net_out2 = {
        'logits_all': jax.random.normal(k1, (B2, C2), jnp.float32),
        'logits_q': jax.random.normal(k2, (B2, C2), jnp.float32),
        'logits_v': jax.random.normal(k3, (B2, C2), jnp.float32),
        'z_nde': jax.random.normal(k4, (B2, C2), jnp.float32),
    }
    cid2 = jax.random.randint(k5, (B2,), 0, C2, jnp.int32)
    r_loss, r_f, r_q, r_v, r_kl = _reference(net_out2, cid2, 0.9, 0.5, 2.0)
    ref2 = jnp.stack([r_loss, r_f, r_q, r_v, r_kl])

    # 2a: explicit small blocks (ragged tail + Buffered(3) path if available).
    vals2a = cfvqa_losses(net_out2['logits_all'], net_out2['logits_q'],
                          net_out2['logits_v'], net_out2['z_nde'], cid2,
                          jnp.float32(0.9), question_loss_weight=0.5,
                          vision_loss_weight=2.0, block_rows=8)
    jax.block_until_ready(vals2a)
    assert jnp.allclose(vals2a, ref2, rtol=2e-5, atol=2e-5)

    # 2b: automatic block choice (exercises the nb>=2 cap + class_id padding).
    vals2b = cfvqa_losses(net_out2['logits_all'], net_out2['logits_q'],
                          net_out2['logits_v'], net_out2['z_nde'], cid2,
                          jnp.float32(0.9), question_loss_weight=0.5,
                          vision_loss_weight=2.0)
    jax.block_until_ready(vals2b)
    assert jnp.allclose(vals2b, ref2, rtol=2e-5, atol=2e-5)

    # --- Test 3: native bf16 logits (no wrapper-side f32 cast) ---
    net_out3 = {k: v.astype(jnp.bfloat16) for k, v in net_out2.items()}
    vals3 = cfvqa_losses(net_out3['logits_all'], net_out3['logits_q'],
                         net_out3['logits_v'], net_out3['z_nde'], cid2,
                         jnp.float32(0.999), question_loss_weight=1.0,
                         vision_loss_weight=1.0, block_rows=8)
    jax.block_until_ready(vals3)
    r_loss, r_f, r_q, r_v, r_kl = _reference(net_out3, cid2, 0.999, 1.0, 1.0)
    ref3 = jnp.stack([r_loss, r_f, r_q, r_v, r_kl])
    assert jnp.allclose(vals3, ref3, rtol=1e-4, atol=1e-4)

    # --- Test 4: is_va=False path (3-input kernel, no vision CE at all) ---
    vals4 = cfvqa_losses(net_out2['logits_all'], net_out2['logits_q'], None,
                         net_out2['z_nde'], cid2, jnp.float32(0.9),
                         question_loss_weight=0.5, vision_loss_weight=0.0,
                         block_rows=8, has_vision=False)
    jax.block_until_ready(vals4)
    r_loss0, r_f0, r_q0, _, r_kl0 = _reference(net_out2, cid2, 0.9, 0.5, 0.0)
    assert jnp.allclose(vals4[0], r_loss0, rtol=2e-5, atol=2e-5)
    assert jnp.allclose(vals4[1], r_f0, rtol=2e-5, atol=2e-5)
    assert jnp.allclose(vals4[2], r_q0, rtol=2e-5, atol=2e-5)
    assert jnp.allclose(vals4[4], r_kl0, rtol=2e-5, atol=2e-5)

    print("KERNEL_OK")
</pallas_src>

<mosaic_0001>
module attributes {stable_mosaic.version = 11 : i64} {
  func.func @_cfvqa_block_kernel(%arg0: i32, %arg1: memref<8x1xi32, #tpu.memory_space<vmem>>, %arg2: memref<8x32xf32, #tpu.memory_space<vmem>>, %arg3: memref<8x32xf32, #tpu.memory_space<vmem>>, %arg4: memref<8x32xf32, #tpu.memory_space<vmem>>, %arg5: memref<8x32xf32, #tpu.memory_space<vmem>>, %arg6: memref<1x8x128xf32, #tpu.memory_space<vmem>>) attributes {dimension_semantics = [#tpu.dimension_semantics<parallel>], iteration_bounds = array<i64: 1>, scalar_prefetch = 0 : i64, scratch_operands = 0 : i64, tpu.core_type = #tpu.core_type<tc>, window_params = [{pipeline_mode = #tpu.pipeline_mode<synchronous>, transform_indices = @transform_0, window_bounds = array<i64: 8, 1>}, {transform_indices = @transform_1, window_bounds = array<i64: 8, 32>}, {transform_indices = @transform_2, window_bounds = array<i64: 8, 32>}, {transform_indices = @transform_3, window_bounds = array<i64: 8, 32>}, {transform_indices = @transform_4, window_bounds = array<i64: 8, 32>}, {transform_indices = @transform_5, window_bounds = array<i64: 1, 8, 128>}]} {
    %c8_i32 = arith.constant 8 : i32
    %0 = arith.muli %arg0, %c8_i32 : i32
    %1 = tpu.assume_multiple %0, 8 : i32
    %2 = arith.index_cast %1 : i32 to index
    %c0 = arith.constant 0 : index
    %3 = vector.load %arg1[%2, %c0] : memref<8x1xi32, #tpu.memory_space<vmem>>, vector<8x1xi32>
    %4 = tpu.iota {dimensions = array<i32: 1>} : vector<8x32xi32>
    %5 = tpu.iota {dimensions = array<i32: 0>} : vector<8x1xi32>
    %c8_i32_0 = arith.constant 8 : i32
    %6 = arith.muli %arg0, %c8_i32_0 : i32
    %7 = vector.broadcast %6 : i32 to vector<8x1xi32>
    %8 = arith.addi %5, %7 : vector<8x1xi32>
    %c8_i32_1 = arith.constant 8 : i32
    %9 = vector.broadcast %c8_i32_1 : i32 to vector<8x1xi32>
    %10 = arith.cmpi slt, %8, %9 : vector<8x1xi32>
    %11 = vector.broadcast %3 : vector<8x1xi32> to vector<8x32xi32>
    %12 = arith.cmpi eq, %4, %11 : vector<8x32xi32>
    %13 = vector.broadcast %10 : vector<8x1xi1> to vector<8x32xi1>
    %14 = arith.andi %12, %13 : vector<8x32xi1>
    %c0_2 = arith.constant 0 : index
    %c0_3 = arith.constant 0 : index
    %15 = vector.load %arg2[%c0_2, %c0_3] : memref<8x32xf32, #tpu.memory_space<vmem>>, vector<8x32xf32>
    %cst = arith.constant dense<0xFF800000> : vector<8xf32>
    %16 = vector.multi_reduction <maximumf>, %15, %cst [1] : vector<8x32xf32> to vector<8xf32>
    %17 = vector.shape_cast %16 : vector<8xf32> to vector<8x1xf32>
    %18 = vector.broadcast %17 : vector<8x1xf32> to vector<8x32xf32>
    %19 = arith.subf %15, %18 : vector<8x32xf32>
    %20 = math.exp %19 : vector<8x32xf32>
    %cst_4 = arith.constant dense<0.000000e+00> : vector<8xf32>
    %21 = vector.multi_reduction <add>, %20, %cst_4 [1] : vector<8x32xf32> to vector<8xf32>
    %22 = vector.shape_cast %21 : vector<8xf32> to vector<8x1xf32>
    %23 = math.log %22 : vector<8x1xf32>
    %cst_5 = arith.constant 0.000000e+00 : f32
    %24 = vector.broadcast %cst_5 : f32 to vector<8x1xf32>
    %25 = arith.select %10, %23, %24 : vector<8x1xi1>, vector<8x1xf32>
    %26 = vector.shape_cast %25 : vector<8x1xf32> to vector<1x8x1xf32>
    %cst_6 = arith.constant dense<0.000000e+00> : vector<1xf32>
    %27 = vector.multi_reduction <add>, %26, %cst_6 [1, 2] : vector<1x8x1xf32> to vector<1xf32>
    %28 = vector.shape_cast %27 : vector<1xf32> to vector<1x1x1xf32>
    %29 = vector.extract %28[0, 0, 0] : f32 from vector<1x1x1xf32>
    %cst_7 = arith.constant 0.000000e+00 : f32
    %30 = vector.broadcast %cst_7 : f32 to vector<8x32xf32>
    %31 = arith.select %14, %19, %30 : vector<8x32xi1>, vector<8x32xf32>
    %32 = vector.shape_cast %31 : vector<8x32xf32> to vector<1x8x32xf32>
    %cst_8 = arith.constant dense<0.000000e+00> : vector<1xf32>
    %33 = vector.multi_reduction <add>, %32, %cst_8 [1, 2] : vector<1x8x32xf32> to vector<1xf32>
    %34 = vector.shape_cast %33 : vector<1xf32> to vector<1x1x1xf32>
    %35 = vector.extract %34[0, 0, 0] : f32 from vector<1x1x1xf32>
    %36 = arith.subf %29, %35 : f32
    %37 = tpu.reciprocal %22 : vector<8x1xf32> -> vector<8x1xf32>
    %38 = vector.broadcast %37 : vector<8x1xf32> to vector<8x32xf32>
    %39 = arith.mulf %20, %38 : vector<8x32xf32>
    %c0_9 = arith.constant 0 : index
    %c0_10 = arith.constant 0 : index
    %40 = vector.load %arg5[%c0_9, %c0_10] : memref<8x32xf32, #tpu.memory_space<vmem>>, vector<8x32xf32>
    %cst_11 = arith.constant dense<0xFF800000> : vector<8xf32>
    %41 = vector.multi_reduction <maximumf>, %40, %cst_11 [1] : vector<8x32xf32> to vector<8xf32>
    %42 = vector.shape_cast %41 : vector<8xf32> to vector<8x1xf32>
    %43 = vector.broadcast %42 : vector<8x1xf32> to vector<8x32xf32>
    %44 = arith.subf %40, %43 : vector<8x32xf32>
    %45 = math.exp %44 : vector<8x32xf32>
    %cst_12 = arith.constant dense<0.000000e+00> : vector<8xf32>
    %46 = vector.multi_reduction <add>, %45, %cst_12 [1] : vector<8x32xf32> to vector<8xf32>
    %47 = vector.shape_cast %46 : vector<8xf32> to vector<8x1xf32>
    %48 = math.log %47 : vector<8x1xf32>
    %cst_13 = arith.constant 0.000000e+00 : f32
    %49 = vector.broadcast %cst_13 : f32 to vector<8x1xf32>
    %50 = arith.select %10, %48, %49 : vector<8x1xi1>, vector<8x1xf32>
    %51 = vector.shape_cast %50 : vector<8x1xf32> to vector<1x8x1xf32>
    %cst_14 = arith.constant dense<0.000000e+00> : vector<1xf32>
    %52 = vector.multi_reduction <add>, %51, %cst_14 [1, 2] : vector<1x8x1xf32> to vector<1xf32>
    %53 = vector.shape_cast %52 : vector<1xf32> to vector<1x1x1xf32>
    %54 = vector.extract %53[0, 0, 0] : f32 from vector<1x1x1xf32>
    %55 = arith.mulf %39, %44 : vector<8x32xf32>
    %cst_15 = arith.constant 0.000000e+00 : f32
    %56 = vector.shape_cast %10 : vector<8x1xi1> to vector<8x1xi1>
    %57 = vector.broadcast %56 : vector<8x1xi1> to vector<8x32xi1>
    %58 = vector.broadcast %cst_15 : f32 to vector<8x32xf32>
    %59 = arith.select %57, %55, %58 : vector<8x32xi1>, vector<8x32xf32>
    %60 = vector.shape_cast %59 : vector<8x32xf32> to vector<1x8x32xf32>
    %cst_16 = arith.constant dense<0.000000e+00> : vector<1xf32>
    %61 = vector.multi_reduction <add>, %60, %cst_16 [1, 2] : vector<1x8x32xf32> to vector<1xf32>
    %62 = vector.shape_cast %61 : vector<1xf32> to vector<1x1x1xf32>
    %63 = vector.extract %62[0, 0, 0] : f32 from vector<1x1x1xf32>
    %64 = arith.subf %54, %63 : f32
    %c0_17 = arith.constant 0 : index
    %c0_18 = arith.constant 0 : index
    %65 = vector.load %arg3[%c0_17, %c0_18] : memref<8x32xf32, #tpu.memory_space<vmem>>, vector<8x32xf32>
    %cst_19 = arith.constant dense<0xFF800000> : vector<8xf32>
    %66 = vector.multi_reduction <maximumf>, %65, %cst_19 [1] : vector<8x32xf32> to vector<8xf32>
    %67 = vector.shape_cast %66 : vector<8xf32> to vector<8x1xf32>
    %68 = vector.broadcast %67 : vector<8x1xf32> to vector<8x32xf32>
    %69 = arith.subf %65, %68 : vector<8x32xf32>
    %70 = math.exp %69 : vector<8x32xf32>
    %cst_20 = arith.constant dense<0.000000e+00> : vector<8xf32>
    %71 = vector.multi_reduction <add>, %70, %cst_20 [1] : vector<8x32xf32> to vector<8xf32>
    %72 = vector.shape_cast %71 : vector<8xf32> to vector<8x1xf32>
    %73 = math.log %72 : vector<8x1xf32>
    %cst_21 = arith.constant 0.000000e+00 : f32
    %74 = vector.broadcast %cst_21 : f32 to vector<8x1xf32>
    %75 = arith.select %10, %73, %74 : vector<8x1xi1>, vector<8x1xf32>
    %76 = vector.shape_cast %75 : vector<8x1xf32> to vector<1x8x1xf32>
    %cst_22 = arith.constant dense<0.000000e+00> : vector<1xf32>
    %77 = vector.multi_reduction <add>, %76, %cst_22 [1, 2] : vector<1x8x1xf32> to vector<1xf32>
    %78 = vector.shape_cast %77 : vector<1xf32> to vector<1x1x1xf32>
    %79 = vector.extract %78[0, 0, 0] : f32 from vector<1x1x1xf32>
    %cst_23 = arith.constant 0.000000e+00 : f32
    %80 = vector.broadcast %cst_23 : f32 to vector<8x32xf32>
    %81 = arith.select %14, %69, %80 : vector<8x32xi1>, vector<8x32xf32>
    %82 = vector.shape_cast %81 : vector<8x32xf32> to vector<1x8x32xf32>
    %cst_24 = arith.constant dense<0.000000e+00> : vector<1xf32>
    %83 = vector.multi_reduction <add>, %82, %cst_24 [1, 2] : vector<1x8x32xf32> to vector<1xf32>
    %84 = vector.shape_cast %83 : vector<1xf32> to vector<1x1x1xf32>
    %85 = vector.extract %84[0, 0, 0] : f32 from vector<1x1x1xf32>
    %86 = arith.subf %79, %85 : f32
    %c0_25 = arith.constant 0 : index
    %c0_26 = arith.constant 0 : index
    %87 = vector.load %arg4[%c0_25, %c0_26] : memref<8x32xf32, #tpu.memory_space<vmem>>, vector<8x32xf32>
    %cst_27 = arith.constant dense<0xFF800000> : vector<8xf32>
    %88 = vector.multi_reduction <maximumf>, %87, %cst_27 [1] : vector<8x32xf32> to vector<8xf32>
    %89 = vector.shape_cast %88 : vector<8xf32> to vector<8x1xf32>
    %90 = vector.broadcast %89 : vector<8x1xf32> to vector<8x32xf32>
    %91 = arith.subf %87, %90 : vector<8x32xf32>
    %92 = math.exp %91 : vector<8x32xf32>
    %cst_28 = arith.constant dense<0.000000e+00> : vector<8xf32>
    %93 = vector.multi_reduction <add>, %92, %cst_28 [1] : vector<8x32xf32> to vector<8xf32>
    %94 = vector.shape_cast %93 : vector<8xf32> to vector<8x1xf32>
    %95 = math.log %94 : vector<8x1xf32>
    %cst_29 = arith.constant 0.000000e+00 : f32
    %96 = vector.broadcast %cst_29 : f32 to vector<8x1xf32>
    %97 = arith.select %10, %95, %96 : vector<8x1xi1>, vector<8x1xf32>
    %98 = vector.shape_cast %97 : vector<8x1xf32> to vector<1x8x1xf32>
    %cst_30 = arith.constant dense<0.000000e+00> : vector<1xf32>
    %99 = vector.multi_reduction <add>, %98, %cst_30 [1, 2] : vector<1x8x1xf32> to vector<1xf32>
    %100 = vector.shape_cast %99 : vector<1xf32> to vector<1x1x1xf32>
    %101 = vector.extract %100[0, 0, 0] : f32 from vector<1x1x1xf32>
    %cst_31 = arith.constant 0.000000e+00 : f32
    %102 = vector.broadcast %cst_31 : f32 to vector<8x32xf32>
    %103 = arith.select %14, %91, %102 : vector<8x32xi1>, vector<8x32xf32>
    %104 = vector.shape_cast %103 : vector<8x32xf32> to vector<1x8x32xf32>
    %cst_32 = arith.constant dense<0.000000e+00> : vector<1xf32>
    %105 = vector.multi_reduction <add>, %104, %cst_32 [1, 2] : vector<1x8x32xf32> to vector<1xf32>
    %106 = vector.shape_cast %105 : vector<1xf32> to vector<1x1x1xf32>
    %107 = vector.extract %106[0, 0, 0] : f32 from vector<1x1x1xf32>
    %108 = arith.subf %101, %107 : f32
    %109 = tpu.iota {dimensions = array<i32: 0>} : vector<8x128xi32>
    %c0_i32 = arith.constant 0 : i32
    %110 = vector.broadcast %c0_i32 : i32 to vector<8x128xi32>
    %111 = arith.cmpi eq, %109, %110 : vector<8x128xi32>
    %cst_33 = arith.constant 0.000000e+00 : f32
    %112 = vector.broadcast %36 : f32 to vector<8x128xf32>
    %113 = vector.broadcast %cst_33 : f32 to vector<8x128xf32>
    %114 = arith.select %111, %112, %113 : vector<8x128xi1>, vector<8x128xf32>
    %c1_i32 = arith.constant 1 : i32
    %115 = vector.broadcast %c1_i32 : i32 to vector<8x128xi32>
    %116 = arith.cmpi eq, %109, %115 : vector<8x128xi32>
    %117 = vector.broadcast %86 : f32 to vector<8x128xf32>
    %118 = arith.select %116, %117, %114 : vector<8x128xi1>, vector<8x128xf32>
    %c2_i32 = arith.constant 2 : i32
    %119 = vector.broadcast %c2_i32 : i32 to vector<8x128xi32>
    %120 = arith.cmpi eq, %109, %119 : vector<8x128xi32>
    %121 = vector.broadcast %108 : f32 to vector<8x128xf32>
    %122 = arith.select %120, %121, %118 : vector<8x128xi1>, vector<8x128xf32>
    %c3_i32 = arith.constant 3 : i32
    %123 = vector.broadcast %c3_i32 : i32 to vector<8x128xi32>
    %124 = arith.cmpi eq, %109, %123 : vector<8x128xi32>
    %125 = vector.broadcast %64 : f32 to vector<8x128xf32>
    %126 = arith.select %124, %125, %122 : vector<8x128xi1>, vector<8x128xf32>
    %c0_34 = arith.constant 0 : index
    %c0_35 = arith.constant 0 : index
    %c0_36 = arith.constant 0 : index
    %127 = vector.load %arg6[%c0_34, %c0_35, %c0_36] : memref<1x8x128xf32, #tpu.memory_space<vmem>>, vector<1x8x128xf32>
    %128 = vector.shape_cast %127 : vector<1x8x128xf32> to vector<8x128xf32>
    %129 = vector.shape_cast %126 : vector<8x128xf32> to vector<1x8x128xf32>
    tpu.vector_store %arg6[%c0_34, %c0_35, %c0_36], %129 {strides = array<i32>} : memref<1x8x128xf32, #tpu.memory_space<vmem>>, vector<1x8x128xf32>,
    return
  }
  func.func @transform_0(%arg0: i32) -> (i32, i32) {
    %c0_i32 = arith.constant 0 : i32
    %c0_i32_0 = arith.constant 0 : i32
    %c0_i32_1 = arith.constant 0 : i32
    return %c0_i32, %c0_i32_0 : i32, i32
  }
  func.func @transform_1(%arg0: i32) -> (i32, i32) {
    %c0_i32 = arith.constant 0 : i32
    %c0_i32_0 = arith.constant 0 : i32
    return %arg0, %c0_i32 : i32, i32
  }
  func.func @transform_2(%arg0: i32) -> (i32, i32) {
    %c0_i32 = arith.constant 0 : i32
    %c0_i32_0 = arith.constant 0 : i32
    return %arg0, %c0_i32 : i32, i32
  }
  func.func @transform_3(%arg0: i32) -> (i32, i32) {
    %c0_i32 = arith.constant 0 : i32
    %c0_i32_0 = arith.constant 0 : i32
    return %arg0, %c0_i32 : i32, i32
  }
  func.func @transform_4(%arg0: i32) -> (i32, i32) {
    %c0_i32 = arith.constant 0 : i32
    %c0_i32_0 = arith.constant 0 : i32
    return %arg0, %c0_i32 : i32, i32
  }
  func.func @transform_5(%arg0: i32) -> (i32, i32, i32) {
    %c0_i32 = arith.constant 0 : i32
    %c0_i32_0 = arith.constant 0 : i32
    %c0_i32_1 = arith.constant 0 : i32
    return %arg0, %c0_i32, %c0_i32_0 : i32, i32, i32
  }
}

</mosaic_0001>

<llo_original>
// kernel: cfvqa_losses.1
$region0: #{cfvqa_losses.1}
  #allocation0 [shape = 'u32[]', space=smem, size = 0x4, offset = 0x4, fixed_abs, tag = 'smem constant byte address 0x4 - core index']
  #allocation1 [shape = 'u32[72,128]{1,0:T(1,128)}', space=vmem, size = 0x9000, scoped, tag = 'internal scratch']
  %s0 = inlined_call_operand.vmem [shape: s32[8,1], index: 0, kind: input, shape index: {}]
  %s1 = inlined_call_operand.vmem [shape: f32[8,32], index: 1, kind: input, shape index: {}]
  %s2 = inlined_call_operand.hbm [shape: f32[8,32], index: 2, kind: input, shape index: {}]
  %s3 = inlined_call_operand.hbm [shape: f32[8,32], index: 3, kind: input, shape index: {}]
  %s4 = inlined_call_operand.hbm [shape: f32[8,32], index: 4, kind: input, shape index: {}]
  %s5 = inlined_call_operand.vmem [shape: f32[1,8,128], index: 5, kind: output, shape index: {}]
  %s6 = sld [smem:[#allocation0]]
  $region42: #{cfvqa_losses.1} parent=0
    _
  %s8 = ssub.s32 1, %s6
  %s9 = scalar_select 0, %s8, %s6
  $region1: #{cfvqa_losses.1} parent=0
    #allocation2 [shape = 'u8[4096]{0}', space=vmem, size = 0x1000, scoped, tag = 'input window, operand 2, single buffered']
    #allocation3 [shape = 's32[1]{0}', space=sflag, size = 0x4, scoped, tag = 'scoped memory for cfvqa_losses.1']
    #allocation4 [shape = 'u8[4096]{0}', space=vmem, size = 0x1000, scoped, tag = 'input window, operand 3, single buffered']
    #allocation5 [shape = 's32[1]{0}', space=sflag, size = 0x4, scoped, tag = 'scoped memory for cfvqa_losses.1']
    #allocation6 [shape = 'u8[4096]{0}', space=vmem, size = 0x1000, scoped, tag = 'input window, operand 4, single buffered']
    %10 = vsyncpa [#allocation3], 0
    %11 = vsyncpa [#allocation5], 0
    // Predicated region
    $region2: #{cfvqa_losses.1} parent=1 // pred_check
      _
    $region3: #{cfvqa_losses.1} parent=1 // pred_check_branch
      %13 = sbr.rel (0) target = $region5
    $region4: #{cfvqa_losses.1} parent=1 // pred_region
      _
    $region5: #{cfvqa_losses.1} parent=1 // pred_fallthru
      _
    // Predicated region
    $region6: #{cfvqa_losses.1} parent=1 // pred_check
      _
    $region7: #{cfvqa_losses.1} parent=1 // pred_check_branch
      %15 = sbr.rel (0) target = $region9
    $region8: #{cfvqa_losses.1} parent=1 // pred_region
      _
    $region9: #{cfvqa_losses.1} parent=1 // pred_fallthru
      _
    // Predicated region
    $region10: #{cfvqa_losses.1} parent=1 // pred_check
      _
    $region11: #{cfvqa_losses.1} parent=1 // pred_check_branch
      %17 = sbr.rel (0) target = $region13
    $region12: #{cfvqa_losses.1} parent=1 // pred_region
      %19 = vsyncadd [#allocation3], 0
      %s21 = sshll.u32 %s2, 4
      %s22 = int_to_ptr.hbm [resolvable:$true] %s21
      %s23 = sshll.u32 [#allocation2], 4
      %s24 = int_to_ptr.vmem [resolvable:$true] %s23
      %26 = dma.hbm_to_vmem [thread:$0]  %s22, 128, %s24, [#allocation3]
    $region13: #{cfvqa_losses.1} parent=1 // pred_fallthru
      _
    // Predicated region
    $region14: #{cfvqa_losses.1} parent=1 // pred_check
      _
    $region15: #{cfvqa_losses.1} parent=1 // pred_check_branch
      %28 = sbr.rel (0) target = $region17
    $region16: #{cfvqa_losses.1} parent=1 // pred_region
      %30 = vsyncadd [#allocation5], 0
      %s32 = sshll.u32 %s3, 4
      %s33 = int_to_ptr.hbm [resolvable:$true] %s32
      %s34 = sshll.u32 [#allocation4], 4
      %s35 = int_to_ptr.vmem [resolvable:$true] %s34
      %37 = dma.hbm_to_vmem [thread:$0]  %s33, 128, %s35, [#allocation5]
    $region17: #{cfvqa_losses.1} parent=1 // pred_fallthru
      _
    // Predicated region
    $region18: #{cfvqa_losses.1} parent=1 // pred_check
      _
    $region19: #{cfvqa_losses.1} parent=1 // pred_check_branch
      %39 = sbr.rel (0) target = $region21
    $region20: #{cfvqa_losses.1} parent=1 // pred_region
      %41 = vsyncadd [#allocation5], 0
      %s43 = sshll.u32 %s4, 4
      %s44 = int_to_ptr.hbm [resolvable:$true] %s43
      %s45 = sshll.u32 [#allocation6], 4
      %s46 = int_to_ptr.vmem [resolvable:$true] %s45
      %48 = dma.hbm_to_vmem [thread:$0]  %s44, 128, %s46, [#allocation5]
    $region21: #{cfvqa_losses.1} parent=1 // pred_fallthru
      _
    // Predicated region
    $region22: #{cfvqa_losses.1} parent=1 // pred_check
      _
    $region23: #{cfvqa_losses.1} parent=1 // pred_check_branch
      %50 = sbr.rel (0) target = $region25
    $region24: #{cfvqa_losses.1} parent=1 // pred_region
      %52 = dma.done [#allocation3], 128
    $region25: #{cfvqa_losses.1} parent=1 // pred_fallthru
      _
    // Predicated region
    $region26: #{cfvqa_losses.1} parent=1 // pred_check
      _
    $region27: #{cfvqa_losses.1} parent=1 // pred_check_branch
      %54 = sbr.rel (0) target = $region29
    $region28: #{cfvqa_losses.1} parent=1 // pred_region
      %56 = dma.done [#allocation5], 128
    $region29: #{cfvqa_losses.1} parent=1 // pred_fallthru
      _
    // Predicated region
    $region30: #{cfvqa_losses.1} parent=1 // pred_check
      _
    $region31: #{cfvqa_losses.1} parent=1 // pred_check_branch
      %58 = sbr.rel (0) target = $region33
    $region32: #{cfvqa_losses.1} parent=1 // pred_region
      %60 = dma.done [#allocation5], 128
    $region33: #{cfvqa_losses.1} parent=1 // pred_fallthru
      _
    %s61 = smul.u32 0, 8
    %s62 = scalar_lea.vmem %s0, %s61
    %v63 = vld [vmem:[%s62] sm:$0xff]
    %v64 = vlaneseq
    %v65 = vand.u32 %v64, 127
    %v66 = vlaneseq
    %v67 = vshrl.u32 %v66, 7
    %v68 = vstv %s61
    %v69 = vadd.s32 %v67, %v68
    %vm70 = vcmp.lt.s32.totalorder %v69, 8
    %71 = vset.pattern.permute.xlu0 0
    %72 = vperm.xlu0 %71, %v63
    %v73 = vpop.permute.xlu0 %72
    %vm74 = vcmp.eq.s32.totalorder %v65, %v73
    %v75 = vsel %vm70, 1, 0
    %vm76 = vcmp.eq.s32.totalorder %v75, 1
    %vm77 = vmand %vm74, %vm76
    %v78 = vld [vmem:[%s1] sm:$0xff]
    %vm79 = vcmask 261120
    %v80 = vsel %vm79, %v78, -inf
    %81 = vmax.xlane.f32.xlu0 %v80
    %v82 = vpop.xlane.xlu0 %81
    %v83 = vsub.f32 %v78, %v82
    %v84 = vmul.f32 %v83, 1.442695
    %v85 = vpow.pop %v84
    %v86 = vsel %vm79, %v85, 0.0
    %87 = vadd.xlane.f32.xlu0 %v86
    %v88 = vpop.xlane.xlu0 %87
    %v89 = vlog2.pop %v88
    %v90 = vmul.f32 %v89, 0.6931472
    %v91 = vsel %vm70, %v90, 0.0
    %vm92 = vcmask 7168
    %v93 = vsel %vm92, %v91, 0.0
    %94 = vadd.xlane.f32.xlu0 %v93
    %v95 = vpop.xlane.xlu0 %94
    %v96 = vrot.slane %v95, 4
    %v97 = vadd.f32 %v95, %v96
    %v98 = vrot.slane %v97, 2
    %v99 = vadd.f32 %v97, %v98
    %v100 = vrot.slane %v99, 1
    %v101 = vadd.f32 %v99, %v100
    %s102 = vtos %v101
    %v103 = vsel %vm77, %v83, 0.0
    %v104 = vsel %vm79, %v103, 0.0
    %105 = vadd.xlane.f32.xlu0 %v104
    %v106 = vpop.xlane.xlu0 %105
    %v107 = vrot.slane %v106, 4
    %v108 = vadd.f32 %v106, %v107
    %v109 = vrot.slane %v108, 2
    %v110 = vadd.f32 %v108, %v109
    %v111 = vrot.slane %v110, 1
    %v112 = vadd.f32 %v110, %v111
    %s113 = vtos %v112
    %s114 = ssub.f32 %s102, %s113
    %v115 = vrcp.pop %v88
    %v116 = vmul.f32 %v88, %v115
    %v117 = vsub.f32 1.0, %v116
    %v118 = vmul.f32 %v115, %v117
    %v119 = vadd.f32 %v115, %v118
    %vm120 = vweird.f32 %v88
    %vm121 = vweird.f32 %v115
    %vm122 = vmor %vm120, %vm121
    %v123 = vsel %vm122, %v115, %v119
    %v124 = vand.u32 2147483647, %v88
    %vm125 = vcmp.eq.f32.partialorder %v124, 8.507059e+37
    %v126 = vand.u32 %v88, 2147483648
    %v127 = vor.u32 1.1754944e-38, %v126
    %v128 = vsel %vm125, %v127, %v123
    %v129 = vmul.f32 %v85, %v128
    %v130 = vld [vmem:[#allocation6] sm:$0xff]
    %v131 = vsel %vm79, %v130, -inf
    %132 = vmax.xlane.f32.xlu0 %v131
    %v133 = vpop.xlane.xlu0 %132
    %v134 = vsub.f32 %v130, %v133
    %v135 = vmul.f32 %v134, 1.442695
    %v136 = vpow.pop %v135
    %v137 = vsel %vm79, %v136, 0.0
    %138 = vadd.xlane.f32.xlu0 %v137
    %v139 = vpop.xlane.xlu0 %138
    %v140 = vlog2.pop %v139
    %v141 = vmul.f32 %v140, 0.6931472
    %v142 = vsel %vm70, %v141, 0.0
    %v143 = vsel %vm92, %v142, 0.0
    %144 = vadd.xlane.f32.xlu0 %v143
    %v145 = vpop.xlane.xlu0 %144
    %v146 = vrot.slane %v145, 4
    %v147 = vadd.f32 %v145, %v146
    %v148 = vrot.slane %v147, 2
    %v149 = vadd.f32 %v147, %v148
    %v150 = vrot.slane %v149, 1
    %v151 = vadd.f32 %v149, %v150
    %s152 = vtos %v151
    %v153 = vmul.f32 %v129, %v134
    %v154 = vsel %vm76, %v153, 0.0
    %v155 = vsel %vm79, %v154, 0.0
    %156 = vadd.xlane.f32.xlu0 %v155
    %v157 = vpop.xlane.xlu0 %156
    %v158 = vrot.slane %v157, 4
    %v159 = vadd.f32 %v157, %v158
    %v160 = vrot.slane %v159, 2
    %v161 = vadd.f32 %v159, %v160
    %v162 = vrot.slane %v161, 1
    %v163 = vadd.f32 %v161, %v162
    %s164 = vtos %v163
    %s165 = ssub.f32 %s152, %s164
    %v166 = vld [vmem:[#allocation2] sm:$0xff]
    %v167 = vsel %vm79, %v166, -inf
    %168 = vmax.xlane.f32.xlu0 %v167
    %v169 = vpop.xlane.xlu0 %168
    %v170 = vsub.f32 %v166, %v169
    %v171 = vmul.f32 %v170, 1.442695
    %v172 = vpow.pop %v171
    %v173 = vsel %vm79, %v172, 0.0
    %174 = vadd.xlane.f32.xlu0 %v173
    %v175 = vpop.xlane.xlu0 %174
    %v176 = vlog2.pop %v175
    %v177 = vmul.f32 %v176, 0.6931472
    %v178 = vsel %vm70, %v177, 0.0
    %v179 = vsel %vm92, %v178, 0.0
    %180 = vadd.xlane.f32.xlu0 %v179
    %v181 = vpop.xlane.xlu0 %180
    %v182 = vrot.slane %v181, 4
    %v183 = vadd.f32 %v181, %v182
    %v184 = vrot.slane %v183, 2
    %v185 = vadd.f32 %v183, %v184
    %v186 = vrot.slane %v185, 1
    %v187 = vadd.f32 %v185, %v186
    %s188 = vtos %v187
    %v189 = vsel %vm77, %v170, 0.0
    %v190 = vsel %vm79, %v189, 0.0
    %191 = vadd.xlane.f32.xlu0 %v190
    %v192 = vpop.xlane.xlu0 %191
    %v193 = vrot.slane %v192, 4
    %v194 = vadd.f32 %v192, %v193
    %v195 = vrot.slane %v194, 2
    %v196 = vadd.f32 %v194, %v195
    %v197 = vrot.slane %v196, 1
    %v198 = vadd.f32 %v196, %v197
    %s199 = vtos %v198
    %s200 = ssub.f32 %s188, %s199
    %v201 = vld [vmem:[#allocation4] sm:$0xff]
    %v202 = vsel %vm79, %v201, -inf
    %203 = vmax.xlane.f32.xlu0 %v202
    %v204 = vpop.xlane.xlu0 %203
    %v205 = vsub.f32 %v201, %v204
    %v206 = vmul.f32 %v205, 1.442695
    %v207 = vpow.pop %v206
    %v208 = vsel %vm79, %v207, 0.0
    %209 = vadd.xlane.f32.xlu0 %v208
    %v210 = vpop.xlane.xlu0 %209
    %v211 = vlog2.pop %v210
    %v212 = vmul.f32 %v211, 0.6931472
    %v213 = vsel %vm70, %v212, 0.0
    %v214 = vsel %vm92, %v213, 0.0
    %215 = vadd.xlane.f32.xlu0 %v214
    %v216 = vpop.xlane.xlu0 %215
    %v217 = vrot.slane %v216, 4
    %v218 = vadd.f32 %v216, %v217
    %v219 = vrot.slane %v218, 2
    %v220 = vadd.f32 %v218, %v219
    %v221 = vrot.slane %v220, 1
    %v222 = vadd.f32 %v220, %v221
    %s223 = vtos %v222
    %v224 = vsel %vm77, %v205, 0.0
    %v225 = vsel %vm79, %v224, 0.0
    %226 = vadd.xlane.f32.xlu0 %v225
    %v227 = vpop.xlane.xlu0 %226
    %v228 = vrot.slane %v227, 4
    %v229 = vadd.f32 %v227, %v228
    %v230 = vrot.slane %v229, 2
    %v231 = vadd.f32 %v229, %v230
    %v232 = vrot.slane %v231, 1
    %v233 = vadd.f32 %v231, %v232
    %s234 = vtos %v233
    %s235 = ssub.f32 %s223, %s234
    %vm236 = vcmp.eq.s32.totalorder %v67, 0
    %v237 = vstv %s114
    %v238 = vsel %vm236, %v237, 0.0
    %vm239 = vcmp.eq.s32.totalorder %v67, 1
    %v240 = vstv %s200
    %v241 = vsel %vm239, %v240, %v238
    %vm242 = vcmp.eq.s32.totalorder %v67, 2
    %v243 = vstv %s235
    %v244 = vsel %vm242, %v243, %v241
    %vm245 = vcmp.eq.s32.totalorder %v67, 3
    %v246 = vstv %s165
    %v247 = vsel %vm245, %v246, %v244
    %248 = vst [vmem:[%s5] sm:$0xff] %v247
    // Predicated region
    $region34: #{cfvqa_losses.1} parent=1 // pred_check
      _
    $region35: #{cfvqa_losses.1} parent=1 // pred_check_branch
      %250 = sbr.rel (0) target = $region37
    $region36: #{cfvqa_losses.1} parent=1 // pred_region
      _
    $region37: #{cfvqa_losses.1} parent=1 // pred_fallthru
      _
    // Predicated region
    $region38: #{cfvqa_losses.1} parent=1 // pred_check
      _
    $region39: #{cfvqa_losses.1} parent=1 // pred_check_branch
      %252 = sbr.rel (0) target = $region41
    $region40: #{cfvqa_losses.1} parent=1 // pred_region
      _
    $region41: #{cfvqa_losses.1} parent=1 // pred_fallthru
      _
    %253 = vsyncpa [#allocation3], 1
    %254 = vsyncpa [#allocation5], 1

</llo_original>
